<compile_context>
chip_gen: v7x
topology: tpu7x:2x2x1
jax: 0.10.0
libtpu: 0.0.40
codegen_flags: <defaults>
</compile_context>

<pallas_src>
import functools

import jax
import jax.numpy as jnp
from jax.experimental import pallas as pl
from jax.experimental.pallas import tpu as pltpu

_LANE = 128
_SUBLANE = 8


def _round_up(v, m):
    return ((v + m - 1) // m) * m


def _mlp_kernel(x_ref, w1_ref, b1_ref, w2_ref, b2_ref, ot_ref):
    # h = relu(x @ W1^T + b1)                          (TN, H1), f32
    h = jnp.dot(x_ref[...], w1_ref[...], preferred_element_type=jnp.float32)
    h = jnp.maximum(h + b1_ref[...], 0.0)
    # u_T = W2_pad8 @ h^T  (contract on H1)            (O8, TN)  lane-dense
    u_t = jax.lax.dot_general(
        w2_ref[...], h.astype(w2_ref.dtype),
        dimension_numbers=(((1,), (1,)), ((), ())),
        preferred_element_type=jnp.float32)
    ot_ref[...] = (u_t + b2_ref[...]).astype(ot_ref.dtype)


def prepare_params(w1, b1, w2, b2, *, dtype=jnp.float32):
    """Repack torch.nn.Linear-layout params once (hoisted off the hot path).

    w1: (H1, D_in), b1: (H1,), w2: (O, H1), b2: (O,)
    Returns (w1_t, b1_2d, w2_pad8, b2_pad8, O).  Matmul operands take `dtype`
    (f32 or bf16); biases stay f32.
    """
    H1, _ = w1.shape
    O = w2.shape[0]
    O8 = _round_up(max(O, 1), _SUBLANE)                  # pad out-rows to 8 sublanes

    w1_t = jnp.asarray(w1, dtype).T                      # (D_in, H1)
    b1_2d = jnp.asarray(b1, jnp.float32).reshape(1, H1)  # (1, H1)
    w2_pad8 = jnp.zeros((O8, H1), dtype).at[:O, :].set(jnp.asarray(w2, dtype))
    b2_pad8 = jnp.zeros((O8, 1), jnp.float32).at[:O, 0].set(
        jnp.asarray(b2, jnp.float32))
    return w1_t, b1_2d, w2_pad8, b2_pad8, O


def two_layer_net_prepared(x, w1_t, b1_2d, w2_pad8, b2_pad8, O, *, tile_n=4096):
    """Forward pass given pre-packed params. x: (N, D_in) -> (N, O), f32."""
    N, D_in = x.shape
    H1 = w1_t.shape[1]
    O8 = w2_pad8.shape[0]

    # Cast x to the matmul operand dtype (ideally x already arrives in that
    # dtype so this is a no-op and read traffic is halved for bf16).
    if x.dtype != w1_t.dtype:
        x = x.astype(w1_t.dtype)

    # Batch tile: multiple of 128 (lane dim of the transposed output block),
    # capped so there are >= 2 grid steps when N is large enough (megacore).
    tile_n = max(_LANE, _round_up(tile_n, _LANE))
    TN = min(tile_n, max(_LANE, _round_up(pl.cdiv(N, 2), _LANE)))
    grid = (pl.cdiv(N, TN),)                             # ragged last block OK

    out_t = pl.pallas_call(
        _mlp_kernel,
        out_shape=jax.ShapeDtypeStruct((O8, N), jnp.float32),
        grid=grid,
        in_specs=[
            pl.BlockSpec((TN, D_in), lambda i: (i, 0)),   # x tile, pipelined
            pl.BlockSpec((D_in, H1), lambda i: (0, 0)),   # W1^T,   resident
            pl.BlockSpec((1, H1), lambda i: (0, 0)),      # b1,     resident
            pl.BlockSpec((O8, H1), lambda i: (0, 0)),     # W2 (row-padded)
            pl.BlockSpec((O8, 1), lambda i: (0, 0)),      # b2 (row-padded)
        ],
        out_specs=pl.BlockSpec((O8, TN), lambda i: (0, i)),  # lane-dense store
        compiler_params=pltpu.CompilerParams(
            dimension_semantics=("parallel",),            # both TCs on v7x
            vmem_limit_bytes=32 * 1024 * 1024,            # fits v7x VMEM
        ),
    )(x, w1_t, b1_2d, w2_pad8, b2_pad8)

    return out_t[:O, :].T                                 # tiny (O, N) -> (N, O)


@functools.partial(jax.jit, static_argnames=("tile_n", "compute_dtype"))
def two_layer_net(x, w1, b1, w2, b2, *, tile_n=4096, compute_dtype=jnp.float32):
    """Forward pass of TwoLayerNet with torch-layout params.

    x: (N, D_in); w1: (H1, D_in); b1: (H1,); w2: (2, H1); b2: (2,)
    returns (N, 2) f32.  compute_dtype=jnp.bfloat16 halves matmul-operand
    read traffic on v6e/v7x (accumulation stays f32).
    """
    w1_t, b1_2d, w2_pad8, b2_pad8, O = prepare_params(
        w1, b1, w2, b2, dtype=compute_dtype)
    return two_layer_net_prepared(
        x.astype(compute_dtype), w1_t, b1_2d, w2_pad8, b2_pad8, O,
        tile_n=tile_n)


def _ref_forward(x, w1, b1, w2, b2):
    h = jnp.maximum(x @ w1.T + b1, 0.0)
    return h @ w2.T + b2


if __name__ == "__main__":
    # Shapes consistent with the module: D_in=16, H1=32, out=2.
    N, D_in, H1, O = 8, 16, 32, 2
    key = jax.random.PRNGKey(0)
    kx, kw1, kb1, kw2, kb2 = jax.random.split(key, 5)

    x = jax.random.normal(kx, (N, D_in), dtype=jnp.float32)

    # torch.nn.Linear-style init: U(-1/sqrt(fan_in), 1/sqrt(fan_in)).
    bound1 = 1.0 / (D_in ** 0.5)
    w1 = jax.random.uniform(kw1, (H1, D_in), jnp.float32, -bound1, bound1)
    b1 = jax.random.uniform(kb1, (H1,), jnp.float32, -bound1, bound1)
    bound2 = 1.0 / (H1 ** 0.5)
    w2 = jax.random.uniform(kw2, (O, H1), jnp.float32, -bound2, bound2)
    b2 = jax.random.uniform(kb2, (O,), jnp.float32, -bound2, bound2)

    # 1) Small batch, f32 (single grid step, block larger than array).
    out = jax.block_until_ready(two_layer_net(x, w1, b1, w2, b2))
    ref = _ref_forward(x, w1, b1, w2, b2)
    assert out.shape == (N, O) and out.dtype == jnp.float32
    assert jnp.allclose(out, ref, atol=1e-5, rtol=1e-5)

    # 2) Larger batch, f32, small tile -> 2 grid steps with a ragged last
    #    block (no wrapper-side padding of x).
    N2 = 200
    x2 = jax.random.normal(jax.random.PRNGKey(1), (N2, D_in), dtype=jnp.float32)
    out2 = jax.block_until_ready(two_layer_net(x2, w1, b1, w2, b2, tile_n=128))
    ref2 = _ref_forward(x2, w1, b1, w2, b2)
    assert out2.shape == (N2, O)
    assert jnp.allclose(out2, ref2, atol=1e-5, rtol=1e-5)

    # 3) Same batch with bf16 matmul operands (f32 accumulate / output).
    out3 = jax.block_until_ready(
        two_layer_net(x2, w1, b1, w2, b2, tile_n=128,
                      compute_dtype=jnp.bfloat16))
    assert out3.shape == (N2, O) and out3.dtype == jnp.float32
    assert jnp.allclose(out3, ref2, atol=5e-2, rtol=5e-2)

    print("KERNEL_OK")
</pallas_src>

<mosaic_0001>
module attributes {stable_mosaic.version = 11 : i64} {
  func.func @_mlp_kernel(%arg0: i32, %arg1: memref<128x16xf32, #tpu.memory_space<vmem>>, %arg2: memref<16x32xf32, #tpu.memory_space<vmem>>, %arg3: memref<1x32xf32, #tpu.memory_space<vmem>>, %arg4: memref<8x32xf32, #tpu.memory_space<vmem>>, %arg5: memref<8x1xf32, #tpu.memory_space<vmem>>, %arg6: memref<8x128xf32, #tpu.memory_space<vmem>>) attributes {dimension_semantics = [#tpu.dimension_semantics<parallel>], iteration_bounds = array<i64: 1>, scalar_prefetch = 0 : i64, scratch_operands = 0 : i64, tpu.core_type = #tpu.core_type<tc>, window_params = [{transform_indices = @transform_0, window_bounds = array<i64: 128, 16>}, {pipeline_mode = #tpu.pipeline_mode<synchronous>, transform_indices = @transform_1, window_bounds = array<i64: 16, 32>}, {pipeline_mode = #tpu.pipeline_mode<synchronous>, transform_indices = @transform_2, window_bounds = array<i64: 1, 32>}, {pipeline_mode = #tpu.pipeline_mode<synchronous>, transform_indices = @transform_3, window_bounds = array<i64: 8, 32>}, {pipeline_mode = #tpu.pipeline_mode<synchronous>, transform_indices = @transform_4, window_bounds = array<i64: 8, 1>}, {transform_indices = @transform_5, window_bounds = array<i64: 8, 128>}]} {
    %c0 = arith.constant 0 : index
    %c0_0 = arith.constant 0 : index
    %0 = vector.load %arg1[%c0, %c0_0] : memref<128x16xf32, #tpu.memory_space<vmem>>, vector<128x16xf32>
    %c0_1 = arith.constant 0 : index
    %c0_2 = arith.constant 0 : index
    %1 = vector.load %arg2[%c0_1, %c0_2] : memref<16x32xf32, #tpu.memory_space<vmem>>, vector<16x32xf32>
    %cst = arith.constant dense<0.000000e+00> : vector<128x32xf32>
    %2 = tpu.matmul %0, %1, %cst {dimension_numbers = #tpu.dot_dimension_numbers<[1], [0], [0], [1], [0, 0, 1, 1], [], []>} : vector<128x16xf32>, vector<16x32xf32>, vector<128x32xf32> -> vector<128x32xf32>
    %c0_3 = arith.constant 0 : index
    %c0_4 = arith.constant 0 : index
    %3 = vector.load %arg3[%c0_3, %c0_4] : memref<1x32xf32, #tpu.memory_space<vmem>>, vector<1x32xf32>
    %4 = vector.broadcast %3 : vector<1x32xf32> to vector<128x32xf32>
    %5 = arith.addf %2, %4 : vector<128x32xf32>
    %cst_5 = arith.constant 0.000000e+00 : f32
    %6 = vector.broadcast %cst_5 : f32 to vector<128x32xf32>
    %7 = arith.maximumf %5, %6 : vector<128x32xf32>
    %c0_6 = arith.constant 0 : index
    %c0_7 = arith.constant 0 : index
    %8 = vector.load %arg4[%c0_6, %c0_7] : memref<8x32xf32, #tpu.memory_space<vmem>>, vector<8x32xf32>
    %cst_8 = arith.constant dense<0.000000e+00> : vector<8x128xf32>
    %9 = tpu.matmul %8, %7, %cst_8 {dimension_numbers = #tpu.dot_dimension_numbers<[1], [1], [0], [0], [0, 0, 1, 0], [], []>} : vector<8x32xf32>, vector<128x32xf32>, vector<8x128xf32> -> vector<8x128xf32>
    %c0_9 = arith.constant 0 : index
    %c0_10 = arith.constant 0 : index
    %10 = vector.load %arg5[%c0_9, %c0_10] : memref<8x1xf32, #tpu.memory_space<vmem>>, vector<8x1xf32>
    %11 = vector.broadcast %10 : vector<8x1xf32> to vector<8x128xf32>
    %12 = arith.addf %9, %11 : vector<8x128xf32>
    %c0_11 = arith.constant 0 : index
    %c0_12 = arith.constant 0 : index
    %13 = vector.load %arg6[%c0_11, %c0_12] : memref<8x128xf32, #tpu.memory_space<vmem>>, vector<8x128xf32>
    tpu.vector_store %arg6[%c0_11, %c0_12], %12 {strides = array<i32>} : memref<8x128xf32, #tpu.memory_space<vmem>>, vector<8x128xf32>,
    return
  }
  func.func @transform_0(%arg0: i32) -> (i32, i32) {
    %c0_i32 = arith.constant 0 : i32
    %c0_i32_0 = arith.constant 0 : i32
    return %arg0, %c0_i32 : i32, i32
  }
  func.func @transform_1(%arg0: i32) -> (i32, i32) {
    %c0_i32 = arith.constant 0 : i32
    %c0_i32_0 = arith.constant 0 : i32
    %c0_i32_1 = arith.constant 0 : i32
    return %c0_i32, %c0_i32_0 : i32, i32
  }
  func.func @transform_2(%arg0: i32) -> (i32, i32) {
    %c0_i32 = arith.constant 0 : i32
    %c0_i32_0 = arith.constant 0 : i32
    %c0_i32_1 = arith.constant 0 : i32
    return %c0_i32, %c0_i32_0 : i32, i32
  }
  func.func @transform_3(%arg0: i32) -> (i32, i32) {
    %c0_i32 = arith.constant 0 : i32
    %c0_i32_0 = arith.constant 0 : i32
    %c0_i32_1 = arith.constant 0 : i32
    return %c0_i32, %c0_i32_0 : i32, i32
  }
  func.func @transform_4(%arg0: i32) -> (i32, i32) {
    %c0_i32 = arith.constant 0 : i32
    %c0_i32_0 = arith.constant 0 : i32
    %c0_i32_1 = arith.constant 0 : i32
    return %c0_i32, %c0_i32_0 : i32, i32
  }
  func.func @transform_5(%arg0: i32) -> (i32, i32) {
    %c0_i32 = arith.constant 0 : i32
    %c0_i32_0 = arith.constant 0 : i32
    return %c0_i32, %arg0 : i32, i32
  }
}

</mosaic_0001>

<llo_original>
// kernel: two_layer_net.1
$region0: #{two_layer_net.1}
  #allocation0 [shape = 'u32[]', space=smem, size = 0x4, offset = 0x4, fixed_abs, tag = 'smem constant byte address 0x4 - core index']
  #allocation1 [shape = 'u32[144,128]{1,0:T(1,128)}', space=vmem, size = 0x12000, scoped, tag = 'internal scratch']
  %s0 = inlined_call_operand.vmem [shape: f32[8,16], index: 0, kind: input, shape index: {}]
  %s1 = inlined_call_operand.vmem [shape: f32[16,32], index: 1, kind: input, shape index: {}]
  %s2 = inlined_call_operand.vmem [shape: f32[1,32], index: 2, kind: input, shape index: {}]
  %s3 = inlined_call_operand.vmem [shape: f32[8,32], index: 3, kind: input, shape index: {}]
  %s4 = inlined_call_operand.vmem [shape: f32[8,1], index: 4, kind: input, shape index: {}]
  %s5 = inlined_call_operand.vmem [shape: f32[8,8], index: 5, kind: output, shape index: {}]
  %s6 = sld [smem:[#allocation0]]
  $region30: #{two_layer_net.1} parent=0
    _
  %s8 = ssub.s32 1, %s6
  %s9 = scalar_select 0, %s8, %s6
  // Predicated region
  $region2: #{two_layer_net.1} parent=0 // pred_check
    _
  $region3: #{two_layer_net.1} parent=0 // pred_check_branch
    %11 = sbr.rel (0) target = $region5
  $region4: #{two_layer_net.1} parent=0 // pred_region
    _
  $region5: #{two_layer_net.1} parent=0 // pred_fallthru
    _
  // Predicated region
  $region6: #{two_layer_net.1} parent=0 // pred_check
    _
  $region7: #{two_layer_net.1} parent=0 // pred_check_branch
    %13 = sbr.rel (0) target = $region9
  $region8: #{two_layer_net.1} parent=0 // pred_region
    _
  $region9: #{two_layer_net.1} parent=0 // pred_fallthru
    _
  // Predicated region
  $region10: #{two_layer_net.1} parent=0 // pred_check
    _
  $region11: #{two_layer_net.1} parent=0 // pred_check_branch
    %15 = sbr.rel (0) target = $region13
  $region12: #{two_layer_net.1} parent=0 // pred_region
    _
  $region13: #{two_layer_net.1} parent=0 // pred_fallthru
    _
  // Predicated region
  $region14: #{two_layer_net.1} parent=0 // pred_check
    _
  $region15: #{two_layer_net.1} parent=0 // pred_check_branch
    %17 = sbr.rel (0) target = $region17
  $region16: #{two_layer_net.1} parent=0 // pred_region
    _
  $region17: #{two_layer_net.1} parent=0 // pred_fallthru
    _
  // Predicated region
  $region18: #{two_layer_net.1} parent=0 // pred_check
    _
  $region19: #{two_layer_net.1} parent=0 // pred_check_branch
    %19 = sbr.rel (0) target = $region21
  $region20: #{two_layer_net.1} parent=0 // pred_region
    _
  $region21: #{two_layer_net.1} parent=0 // pred_fallthru
    _
  %v20 = vld [vmem:[%s0] sm:$0xff]
  %v21 = vld [vmem:[%s0 + $0x8] sm:$0xff]
  %v22 = vld [vmem:[%s0 + $0x10] sm:$0xff]
  %v23 = vld [vmem:[%s0 + $0x18] sm:$0xff]
  %v24 = vld [vmem:[%s0 + $0x20] sm:$0xff]
  %v25 = vld [vmem:[%s0 + $0x28] sm:$0xff]
  %v26 = vld [vmem:[%s0 + $0x30] sm:$0xff]
  %v27 = vld [vmem:[%s0 + $0x38] sm:$0xff]
  %v28 = vld [vmem:[%s0 + $0x40] sm:$0xff]
  %v29 = vld [vmem:[%s0 + $0x48] sm:$0xff]
  %v30 = vld [vmem:[%s0 + $0x50] sm:$0xff]
  %v31 = vld [vmem:[%s0 + $0x58] sm:$0xff]
  %v32 = vld [vmem:[%s0 + $0x60] sm:$0xff]
  %v33 = vld [vmem:[%s0 + $0x68] sm:$0xff]
  %v34 = vld [vmem:[%s0 + $0x70] sm:$0xff]
  %v35 = vld [vmem:[%s0 + $0x78] sm:$0xff]
  %v36 = vld [vmem:[%s1] sm:$0xff]
  %v37 = vld [vmem:[%s1 + $0x8] sm:$0xff]
  %v38 = vld [vmem:[%s2] sm:$0x1]
  %v40 = vlaneseq
  %v41 = vshrl.u32 %v40, 7
  %v42 = vsub.s32 0, %v41
  %v43 = vrot.slane %v38, %v42
  %vm45 = vcmask 130048
  %v47 = vsel %vm45, %v20, 0
  %v50 = vsel %vm45, %v21, 0
  %v53 = vsel %vm45, %v22, 0
  %v56 = vsel %vm45, %v23, 0
  %v59 = vsel %vm45, %v24, 0
  %v62 = vsel %vm45, %v25, 0
  %v65 = vsel %vm45, %v26, 0
  %v68 = vsel %vm45, %v27, 0
  %v71 = vsel %vm45, %v28, 0
  %v74 = vsel %vm45, %v29, 0
  %v77 = vsel %vm45, %v30, 0
  %v80 = vsel %vm45, %v31, 0
  %v83 = vsel %vm45, %v32, 0
  %v86 = vsel %vm45, %v33, 0
  %v89 = vsel %vm45, %v34, 0
  %v92 = vsel %vm45, %v35, 0
  %94 = vmatprep.subr.mxu0 0.0
  %95 = vmatpush1.msra.mxu0 %v36
  %96 = vmatprep.subr.mxu0 0.0
  %97 = vmatpush1.msra.mxu0 %v37
  %98 = vmatprep.subr.mxu0 0.0
  %99 = vmatpush1.msra.mxu0 0.0
  %100 = vmatprep.subr.mxu0 0.0
  %101 = vmatpush1.msra.mxu0 0.0
  %102 = vmatprep.subr.mxu0 0.0
  %103 = vmatpush1.msra.mxu0 0.0
  %104 = vmatprep.subr.mxu0 0.0
  %105 = vmatpush1.msra.mxu0 0.0
  %106 = vmatprep.subr.mxu0 0.0
  %107 = vmatpush1.msra.mxu0 0.0
  %108 = vmatprep.subr.mxu0 0.0
  %109 = vmatpush1.msra.mxu0 0.0
  %110 = vmatprep.subr.mxu0 0.0
  %111 = vmatpush1.msra.mxu0 0.0
  %112 = vmatprep.subr.mxu0 0.0
  %113 = vmatpush1.msra.mxu0 0.0
  %114 = vmatprep.subr.mxu0 0.0
  %115 = vmatpush1.msra.mxu0 0.0
  %116 = vmatprep.subr.mxu0 0.0
  %117 = vmatpush1.msra.mxu0 0.0
  %118 = vmatprep.subr.mxu0 0.0
  %119 = vmatpush1.msra.mxu0 0.0
  %120 = vmatprep.subr.mxu0 0.0
  %121 = vmatpush1.msra.mxu0 0.0
  %122 = vmatprep.subr.mxu0 0.0
  %123 = vmatpush1.msra.mxu0 0.0
  %124 = vmatprep.subr.mxu0 0.0
  %125 = vmatpush1.msra.mxu0 0.0
  %126 = vmatprep.subr.mxu0 0.0
  %127 = vmatpush1.msra.mxu0 0.0
  %128 = vmatprep.subr.mxu0 0.0
  %129 = vmatpush1.msra.mxu0 0.0
  %130 = vmatprep.subr.mxu0 0.0
  %131 = vmatpush1.msra.mxu0 0.0
  %132 = vmatprep.subr.mxu0 0.0
  %133 = vmatpush1.msra.mxu0 0.0
  %134 = vmatprep.subr.mxu0 0.0
  %135 = vmatpush1.msra.mxu0 0.0
  %136 = vmatprep.subr.mxu0 0.0
  %137 = vmatpush1.msra.mxu0 0.0
  %138 = vmatprep.subr.mxu0 0.0
  %139 = vmatpush1.msra.mxu0 0.0
  %140 = vmatprep.subr.mxu0 0.0
  %141 = vmatpush1.msra.mxu0 0.0
  %142 = vmatprep.subr.mxu0 0.0
  %143 = vmatpush1.msra.mxu0 0.0
  %144 = vmatprep.subr.mxu0 0.0
  %145 = vmatpush1.msra.mxu0 0.0
  %146 = vmatprep.subr.mxu0 0.0
  %147 = vmatpush1.msra.mxu0 0.0
  %148 = vmatprep.subr.mxu0 0.0
  %149 = vmatpush1.msra.mxu0 0.0
  %150 = vmatprep.subr.mxu0 0.0
  %151 = vmatpush1.msra.mxu0 0.0
  %152 = vmatprep.subr.mxu0 0.0
  %153 = vmatpush1.msra.mxu0 0.0
  %154 = vmatprep.subr.mxu0 0.0
  %155 = vmatpush1.msra.mxu0 0.0
  %156 = vmatprep.subr.mxu0 0.0
  %157 = vmatpush1.msra.mxu0 0.0
  %158 = vmatprep.mubr.f32.mxu0 0.0
  %159 = vmatmul.mubr.f32.gmra.mrb[0].mxu0 %v47
  %v160 = vpop.f32.mrb[0].mxu0
  %v161 = vadd.f32 %v43, %v160
  %v162 = vpop.f32.mrb[0].mxu0
  %163 = vmatprep.mubr.f32.mxu0 0.0
  %164 = vmatmul.mubr.f32.gmra.mrb[0].mxu0 %v50
  %v165 = vpop.f32.mrb[0].mxu0
  %v166 = vadd.f32 %v43, %v165
  %v167 = vpop.f32.mrb[0].mxu0
  %168 = vmatprep.mubr.f32.mxu0 0.0
  %169 = vmatmul.mubr.f32.gmra.mrb[0].mxu0 %v53
  %v170 = vpop.f32.mrb[0].mxu0
  %v171 = vadd.f32 %v43, %v170
  %v172 = vpop.f32.mrb[0].mxu0
  %173 = vmatprep.mubr.f32.mxu0 0.0
  %174 = vmatmul.mubr.f32.gmra.mrb[0].mxu0 %v56
  %v175 = vpop.f32.mrb[0].mxu0
  %v176 = vadd.f32 %v43, %v175
  %v177 = vpop.f32.mrb[0].mxu0
  %178 = vmatprep.mubr.f32.mxu0 0.0
  %179 = vmatmul.mubr.f32.gmra.mrb[0].mxu0 %v59
  %v180 = vpop.f32.mrb[0].mxu0
  %v181 = vadd.f32 %v43, %v180
  %v182 = vpop.f32.mrb[0].mxu0
  %183 = vmatprep.mubr.f32.mxu0 0.0
  %184 = vmatmul.mubr.f32.gmra.mrb[0].mxu0 %v62
  %v185 = vpop.f32.mrb[0].mxu0
  %v186 = vadd.f32 %v43, %v185
  %v187 = vpop.f32.mrb[0].mxu0
  %188 = vmatprep.mubr.f32.mxu0 0.0
  %189 = vmatmul.mubr.f32.gmra.mrb[0].mxu0 %v65
  %v190 = vpop.f32.mrb[0].mxu0
  %v191 = vadd.f32 %v43, %v190
  %v192 = vpop.f32.mrb[0].mxu0
  %193 = vmatprep.mubr.f32.mxu0 0.0
  %194 = vmatmul.mubr.f32.gmra.mrb[0].mxu0 %v68
  %v195 = vpop.f32.mrb[0].mxu0
  %v196 = vadd.f32 %v43, %v195
  %v197 = vpop.f32.mrb[0].mxu0
  %198 = vmatprep.mubr.f32.mxu0 0.0
  %199 = vmatmul.mubr.f32.gmra.mrb[0].mxu0 %v71
  %v200 = vpop.f32.mrb[0].mxu0
  %v201 = vadd.f32 %v43, %v200
  %v202 = vpop.f32.mrb[0].mxu0
  %203 = vmatprep.mubr.f32.mxu0 0.0
  %204 = vmatmul.mubr.f32.gmra.mrb[0].mxu0 %v74
  %v205 = vpop.f32.mrb[0].mxu0
  %v206 = vadd.f32 %v43, %v205
  %v207 = vpop.f32.mrb[0].mxu0
  %208 = vmatprep.mubr.f32.mxu0 0.0
  %209 = vmatmul.mubr.f32.gmra.mrb[0].mxu0 %v77
  %v210 = vpop.f32.mrb[0].mxu0
  %v211 = vadd.f32 %v43, %v210
  %v212 = vpop.f32.mrb[0].mxu0
  %213 = vmatprep.mubr.f32.mxu0 0.0
  %214 = vmatmul.mubr.f32.gmra.mrb[0].mxu0 %v80
  %v215 = vpop.f32.mrb[0].mxu0
  %v216 = vadd.f32 %v43, %v215
  %v217 = vpop.f32.mrb[0].mxu0
  %218 = vmatprep.mubr.f32.mxu0 0.0
  %219 = vmatmul.mubr.f32.gmra.mrb[0].mxu0 %v83
  %v220 = vpop.f32.mrb[0].mxu0
  %v221 = vadd.f32 %v43, %v220
  %v222 = vpop.f32.mrb[0].mxu0
  %223 = vmatprep.mubr.f32.mxu0 0.0
  %224 = vmatmul.mubr.f32.gmra.mrb[0].mxu0 %v86
  %v225 = vpop.f32.mrb[0].mxu0
  %v226 = vadd.f32 %v43, %v225
  %v227 = vpop.f32.mrb[0].mxu0
  %228 = vmatprep.mubr.f32.mxu0 0.0
  %229 = vmatmul.mubr.f32.gmra.mrb[0].mxu0 %v89
  %v230 = vpop.f32.mrb[0].mxu0
  %v231 = vadd.f32 %v43, %v230
  %v232 = vpop.f32.mrb[0].mxu0
  %233 = vmatprep.mubr.f32.mxu0 0.0
  %234 = vmatmul.mubr.f32.gmra.mrb[0].mxu0 %v92
  %v235 = vpop.f32.mrb[0].mxu0
  %v236 = vadd.f32 %v43, %v235
  %v237 = vpop.f32.mrb[0].mxu0
  %238 = vdwg.mxu0
  %v239 = vmax.f32 %v161, 0.0
  %v240 = vmax.f32 %v166, 0.0
  %v241 = vmax.f32 %v171, 0.0
  %v242 = vmax.f32 %v176, 0.0
  %v243 = vmax.f32 %v181, 0.0
  %v244 = vmax.f32 %v186, 0.0
  %v245 = vmax.f32 %v191, 0.0
  %v246 = vmax.f32 %v196, 0.0
  %v247 = vmax.f32 %v201, 0.0
  %v248 = vmax.f32 %v206, 0.0
  %v249 = vmax.f32 %v211, 0.0
  %v250 = vmax.f32 %v216, 0.0
  %v251 = vmax.f32 %v221, 0.0
  %v252 = vmax.f32 %v226, 0.0
  %v253 = vmax.f32 %v231, 0.0
  %v254 = vmax.f32 %v236, 0.0
  %v255 = vld [vmem:[%s3] sm:$0xff]
  %v256 = vld [vmem:[%s4] sm:$0xff]
  %258 = vset.pattern.permute.xlu0 0
  %259 = vperm.xlu0 %258, %v256
  %v260 = vpop.permute.xlu0 %259
  %vm262 = vcmask 261120
  %v264 = vsel %vm262, %v255, 0
  %v267 = vsel %vm262, %v239, 0
  %v270 = vsel %vm262, %v240, 0
  %v273 = vsel %vm262, %v241, 0
  %v276 = vsel %vm262, %v242, 0
  %v279 = vsel %vm262, %v243, 0
  %v282 = vsel %vm262, %v244, 0
  %v285 = vsel %vm262, %v245, 0
  %v288 = vsel %vm262, %v246, 0
  %v291 = vsel %vm262, %v247, 0
  %v294 = vsel %vm262, %v248, 0
  %v297 = vsel %vm262, %v249, 0
  %v300 = vsel %vm262, %v250, 0
  %v303 = vsel %vm262, %v251, 0
  %v306 = vsel %vm262, %v252, 0
  %v309 = vsel %vm262, %v253, 0
  %v312 = vsel %vm262, %v254, 0
  %314 = vmatprep.subr.mxu0 0.0
  %315 = vmatpush1.xpose.msra.mxu0 %v267
  %316 = vmatprep.subr.mxu0 0.0
  %317 = vmatpush1.xpose.msra.mxu0 %v270
  %318 = vmatprep.subr.mxu0 0.0
  %319 = vmatpush1.xpose.msra.mxu0 %v273
  %320 = vmatprep.subr.mxu0 0.0
  %321 = vmatpush1.xpose.msra.mxu0 %v276
  %322 = vmatprep.subr.mxu0 0.0
  %323 = vmatpush1.xpose.msra.mxu0 %v279
  %324 = vmatprep.subr.mxu0 0.0
  %325 = vmatpush1.xpose.msra.mxu0 %v282
  %326 = vmatprep.subr.mxu0 0.0
  %327 = vmatpush1.xpose.msra.mxu0 %v285
  %328 = vmatprep.subr.mxu0 0.0
  %329 = vmatpush1.xpose.msra.mxu0 %v288
  %330 = vmatprep.subr.mxu0 0.0
  %331 = vmatpush1.xpose.msra.mxu0 %v291
  %332 = vmatprep.subr.mxu0 0.0
  %333 = vmatpush1.xpose.msra.mxu0 %v294
  %334 = vmatprep.subr.mxu0 0.0
  %335 = vmatpush1.xpose.msra.mxu0 %v297
  %336 = vmatprep.subr.mxu0 0.0
  %337 = vmatpush1.xpose.msra.mxu0 %v300
  %338 = vmatprep.subr.mxu0 0.0
  %339 = vmatpush1.xpose.msra.mxu0 %v303
  %340 = vmatprep.subr.mxu0 0.0
  %341 = vmatpush1.xpose.msra.mxu0 %v306
  %342 = vmatprep.subr.mxu0 0.0
  %343 = vmatpush1.xpose.msra.mxu0 %v309
  %344 = vmatprep.subr.mxu0 0.0
  %345 = vmatpush1.xpose.msra.mxu0 %v312
  %346 = vmatprep.subr.mxu0 0.0
  %347 = vmatpush1.xpose.msra.mxu0 0.0
  %348 = vmatprep.subr.mxu0 0.0
  %349 = vmatpush1.xpose.msra.mxu0 0.0
  %350 = vmatprep.subr.mxu0 0.0
  %351 = vmatpush1.xpose.msra.mxu0 0.0
  %352 = vmatprep.subr.mxu0 0.0
  %353 = vmatpush1.xpose.msra.mxu0 0.0
  %354 = vmatprep.subr.mxu0 0.0
  %355 = vmatpush1.xpose.msra.mxu0 0.0
  %356 = vmatprep.subr.mxu0 0.0
  %357 = vmatpush1.xpose.msra.mxu0 0.0
  %358 = vmatprep.subr.mxu0 0.0
  %359 = vmatpush1.xpose.msra.mxu0 0.0
  %360 = vmatprep.subr.mxu0 0.0
  %361 = vmatpush1.xpose.msra.mxu0 0.0
  %362 = vmatprep.subr.mxu0 0.0
  %363 = vmatpush1.xpose.msra.mxu0 0.0
  %364 = vmatprep.subr.mxu0 0.0
  %365 = vmatpush1.xpose.msra.mxu0 0.0
  %366 = vmatprep.subr.mxu0 0.0
  %367 = vmatpush1.xpose.msra.mxu0 0.0
  %368 = vmatprep.subr.mxu0 0.0
  %369 = vmatpush1.xpose.msra.mxu0 0.0
  %370 = vmatprep.subr.mxu0 0.0
  %371 = vmatpush1.xpose.msra.mxu0 0.0
  %372 = vmatprep.subr.mxu0 0.0
  %373 = vmatpush1.xpose.msra.mxu0 0.0
  %374 = vmatprep.subr.mxu0 0.0
  %375 = vmatpush1.xpose.msra.mxu0 0.0
  %376 = vmatprep.subr.mxu0 0.0
  %377 = vmatpush1.xpose.msra.mxu0 0.0
  %378 = vmatprep.mubr.f32.mxu0 0.0
  %379 = vmatmul.mubr.f32.gmra.mrb[0].mxu0 %v264
  %v380 = vpop.f32.mrb[0].mxu0
  %v381 = vadd.f32 %v260, %v380
  %v382 = vpop.f32.mrb[0].mxu0
  %383 = vdwg.mxu0
  %384 = vst [vmem:[%s5] sm:$0xff] %v381
  // Predicated region
  $region22: #{two_layer_net.1} parent=0 // pred_check
    _
  $region23: #{two_layer_net.1} parent=0 // pred_check_branch
    %386 = sbr.rel (0) target = $region25
  $region24: #{two_layer_net.1} parent=0 // pred_region
    _
  $region25: #{two_layer_net.1} parent=0 // pred_fallthru
    _
  // Predicated region
  $region26: #{two_layer_net.1} parent=0 // pred_check
    _
  $region27: #{two_layer_net.1} parent=0 // pred_check_branch
    %388 = sbr.rel (0) target = $region29
  $region28: #{two_layer_net.1} parent=0 // pred_region
    _
  $region29: #{two_layer_net.1} parent=0 // pred_fallthru
    _

</llo_original>
